<compile_context>
chip_gen: v5e
topology: v5e:2x2
jax: 0.10.0
libtpu: 0.0.40
codegen_flags: <defaults>
</compile_context>

<pallas_src>
import functools

import jax
import jax.numpy as jnp
from jax.experimental import pallas as pl
from jax.experimental.pallas import tpu as pltpu

_LANES = 128
_SUBLANES = 8
_MAX_BLOCK_ROWS = 8192            # (8192, 128) f32 = 4 MiB per input block.
_NUM_CORES = 2                    # v7x has 2 TCs; harmless (sequential) on 1-TC chips.
_VMEM_LIMIT_BYTES = 48 * 1024 * 1024


def _bce_sum_kernel(p_ref, t_ref, out_ref, *, block_rows, chunk_rows,
                    blocks_per_core, n_blocks, valid_rows_last, hard_labels):
    """Accumulate the clamped binary-cross-entropy sum into a per-core (8,128) block."""
    c = pl.program_id(0)                      # parallel (core) axis
    j = pl.program_id(1)                      # sequential block axis
    blk = c * blocks_per_core + j             # global block id

    @pl.when(j == 0)
    def _():
        out_ref[...] = jnp.zeros_like(out_ref)

    n_chunks = block_rows // chunk_rows

    def accumulate(row_limit):
        # row_limit is a trace-time constant; None => every row of the block is valid.
        def chunk_body(ci, carry):
            start = pl.multiple_of(ci * chunk_rows, chunk_rows)
            p = p_ref[pl.ds(start, chunk_rows), :].astype(jnp.float32)
            t = t_ref[pl.ds(start, chunk_rows), :]
            if hard_labels:
                # Hard {0,1} labels: one EUP log per element (keeps v7x HBM-bound).
                pt = jnp.where(t != 0, p, 1.0 - p)
                bce = -jnp.maximum(jnp.log(pt), -100.0)
            else:
                tf = t.astype(jnp.float32)
                # torch F.binary_cross_entropy clamps each log term at -100.
                log_p = jnp.maximum(jnp.log(p), -100.0)
                log_1mp = jnp.maximum(jnp.log(1.0 - p), -100.0)
                bce = -(tf * log_p + (1.0 - tf) * log_1mp)
            if row_limit is not None:
                # True select: discards NaN/Inf produced by garbage OOB rows.
                row_ids = jax.lax.broadcasted_iota(jnp.int32, bce.shape, 0)
                bce = jnp.where(row_ids < (row_limit - start), bce, 0.0)
            # Per-vreg partial sums: groups whole (8,128) vregs -> pure VPU adds.
            out_ref[...] += bce.reshape(chunk_rows // _SUBLANES, _SUBLANES,
                                        _LANES).sum(axis=0)
            return carry

        jax.lax.fori_loop(0, n_chunks, chunk_body, 0)

    last = n_blocks - 1
    if valid_rows_last != block_rows:
        # Ragged grid: only the LAST block pays the row mask; earlier blocks skip it.
        @pl.when(blk < last)
        def _():
            accumulate(None)

        @pl.when(blk == last)
        def _():
            accumulate(valid_rows_last)
    elif _NUM_CORES * blocks_per_core != n_blocks:
        # Even division of rows but odd block count: skip the duplicated overrun step.
        @pl.when(blk < n_blocks)
        def _():
            accumulate(None)
    else:
        accumulate(None)


def focal_loss(y_pred, y_true, alpha=0.5, gamma=2.0):
    """Pallas TPU implementation of FocalLoss.forward. Returns a scalar f32."""
    p_flat = jnp.reshape(y_pred, (-1,))
    t_flat = jnp.reshape(y_true, (-1,))
    n = p_flat.shape[0]

    # y_pred: f32 / bf16 stream natively (upcast in-kernel); others promoted once.
    if p_flat.dtype not in (jnp.dtype(jnp.float32), jnp.dtype(jnp.bfloat16)):
        p_flat = p_flat.astype(jnp.float32)
    # y_true: integer/bool targets stream natively at 1 B/elem (hard-label, single-log
    # path); float targets stream as f32/bf16 (exact soft-label path).
    if t_flat.dtype == jnp.dtype(jnp.bool_):
        # TODO(synk): bitcast bool->int8 instead of astype to avoid this 1B->1B copy.
        t_flat = t_flat.astype(jnp.int8)
    hard_labels = bool(jnp.issubdtype(t_flat.dtype, jnp.integer))
    if not hard_labels and t_flat.dtype not in (jnp.dtype(jnp.float32),
                                                jnp.dtype(jnp.bfloat16)):
        t_flat = t_flat.astype(jnp.float32)

    # Sublane alignment required by packed dtypes: 8 rows (4B), 16 (2B), 32 (1B).
    row_align = max(_SUBLANES,
                    32 // p_flat.dtype.itemsize,
                    32 // t_flat.dtype.itemsize)

    if n % _LANES != 0 or n < row_align * _LANES:
        # Rare sub-128 tail or tiny input: zero-pad with p=0, t=0, whose clamped-BCE
        # contribution is exactly 0 (so no extra in-kernel masking is needed).
        # TODO(synk): absorb the sub-128 tail via a manual tail DMA instead of a
        # full-array pad copy.
        tile = row_align * _LANES
        pad = (-n) % tile
        p_flat = jnp.pad(p_flat, (0, pad))
        t_flat = jnp.pad(t_flat, (0, pad))

    rows = p_flat.shape[0] // _LANES
    block_rows = min(_MAX_BLOCK_ROWS, rows - rows % row_align)   # multiple of row_align
    n_blocks = -(-rows // block_rows)                            # cdiv
    valid_rows_last = rows - (n_blocks - 1) * block_rows         # rows valid in last block
    blocks_per_core = -(-n_blocks // _NUM_CORES)

    # Chunk size for the in-kernel fori_loop (bounds vreg live ranges for big blocks).
    chunk_rows = block_rows
    for cand in (1024, 512, 256, 128, 64, 32, 16, 8):
        if cand % row_align == 0 and block_rows % cand == 0:
            chunk_rows = cand
            break

    p2d = p_flat.reshape(rows, _LANES)   # trivial reshape: no HBM copy
    t2d = t_flat.reshape(rows, _LANES)

    def in_index_map(c, j):
        # Clamp so the (harmless, pl.when-skipped) overrun step never indexes past the
        # array; a repeated block index also lets Pallas skip the redundant DMA.
        return (jnp.minimum(c * blocks_per_core + j, n_blocks - 1), 0)

    kernel = functools.partial(
        _bce_sum_kernel,
        block_rows=block_rows,
        chunk_rows=chunk_rows,
        blocks_per_core=blocks_per_core,
        n_blocks=n_blocks,
        valid_rows_last=valid_rows_last,
        hard_labels=hard_labels,
    )

    partials = pl.pallas_call(
        kernel,
        out_shape=jax.ShapeDtypeStruct((_NUM_CORES * _SUBLANES, _LANES), jnp.float32),
        grid_spec=pltpu.PrefetchScalarGridSpec(
            num_scalar_prefetch=0,
            grid=(_NUM_CORES, blocks_per_core),
            in_specs=[
                pl.BlockSpec((block_rows, _LANES), in_index_map),
                pl.BlockSpec((block_rows, _LANES), in_index_map),
            ],
            out_specs=pl.BlockSpec((_SUBLANES, _LANES), lambda c, j: (c, 0)),
        ),
        compiler_params=pltpu.CompilerParams(
            dimension_semantics=("parallel", "arbitrary"),
            vmem_limit_bytes=_VMEM_LIMIT_BYTES,
        ),
    )(p2d, t2d)

    # O(1) epilogue: combine the per-core (8,128) partials, take the mean over the
    # ORIGINAL element count (padding contributed 0), apply the focal transform.
    bce_mean = jnp.sum(partials, dtype=jnp.float32) / jnp.float32(n)
    bce_exp = jnp.exp(-bce_mean)
    return jnp.float32(alpha) * (1.0 - bce_exp) ** jnp.float32(gamma) * bce_mean


def _focal_loss_ref(y_pred, y_true, alpha=0.5, gamma=2.0):
    p = y_pred.reshape(-1).astype(jnp.float32)
    t = y_true.reshape(-1).astype(jnp.float32)
    log_p = jnp.maximum(jnp.log(p), -100.0)
    log_1mp = jnp.maximum(jnp.log(1.0 - p), -100.0)
    bce = jnp.mean(-(t * log_p + (1.0 - t) * log_1mp))
    bce_exp = jnp.exp(-bce)
    return alpha * (1.0 - bce_exp) ** gamma * bce


if __name__ == "__main__":
    key = jax.random.PRNGKey(0)
    k1, k2, k3, k4, k5, k6 = jax.random.split(key, 6)

    # 1) Standard small NCHW case: batch=2, channels=4, spatial=16x16 (aligned path).
    shape = (2, 4, 16, 16)
    y_pred = jax.nn.sigmoid(jax.random.normal(k1, shape, dtype=jnp.float32))
    y_true = (jax.random.uniform(k2, shape) > 0.5).astype(jnp.float32)
    loss = jax.block_until_ready(focal_loss(y_pred, y_true, alpha=0.5, gamma=2.0))
    ref = _focal_loss_ref(y_pred, y_true, alpha=0.5, gamma=2.0)
    if not jnp.allclose(loss, ref, rtol=1e-5, atol=1e-6):
        raise AssertionError(f"aligned case mismatch: kernel={loss} ref={ref}")

    # 2) Ragged case (n % 1024 != 0 but n % 128 == 0): no pad, in-kernel row mask.
    shape_r = (2, 4, 20, 16)
    y_pred_r = jax.nn.sigmoid(jax.random.normal(k3, shape_r, dtype=jnp.float32))
    y_true_r = (jax.random.uniform(k4, shape_r) > 0.5).astype(jnp.float32)
    loss_r = jax.block_until_ready(focal_loss(y_pred_r, y_true_r, alpha=0.5, gamma=2.0))
    ref_r = _focal_loss_ref(y_pred_r, y_true_r, alpha=0.5, gamma=2.0)
    if not jnp.allclose(loss_r, ref_r, rtol=1e-5, atol=1e-6):
        raise AssertionError(f"ragged case mismatch: kernel={loss_r} ref={ref_r}")

    # 3) Hard-label int8 targets: native 1 B/elem streaming + single-log path.
    shape_h = (2, 4, 32, 16)
    y_pred_h = jax.nn.sigmoid(jax.random.normal(k5, shape_h, dtype=jnp.float32))
    y_true_h = (jax.random.uniform(k6, shape_h) > 0.5).astype(jnp.int8)
    loss_h = jax.block_until_ready(focal_loss(y_pred_h, y_true_h, alpha=0.5, gamma=2.0))
    ref_h = _focal_loss_ref(y_pred_h, y_true_h, alpha=0.5, gamma=2.0)
    if not jnp.allclose(loss_h, ref_h, rtol=1e-5, atol=1e-6):
        raise AssertionError(f"hard-label case mismatch: kernel={loss_h} ref={ref_h}")

    print("KERNEL_OK")
</pallas_src>

<mosaic_0001>
module attributes {stable_mosaic.version = 11 : i64} {
  func.func @_bce_sum_kernel(%arg0: i32, %arg1: i32, %arg2: memref<16x128xf32, #tpu.memory_space<vmem>>, %arg3: memref<16x128xf32, #tpu.memory_space<vmem>>, %arg4: memref<8x128xf32, #tpu.memory_space<vmem>>) attributes {dimension_semantics = [#tpu.dimension_semantics<parallel>, #tpu.dimension_semantics<arbitrary>], iteration_bounds = array<i64: 2, 1>, scalar_prefetch = 0 : i64, scratch_operands = 0 : i64, tpu.core_type = #tpu.core_type<tc>, window_params = [{transform_indices = @transform_0, window_bounds = array<i64: 16, 128>}, {transform_indices = @transform_1, window_bounds = array<i64: 16, 128>}, {transform_indices = @transform_2, window_bounds = array<i64: 8, 128>}]} {
    %c1_i32 = arith.constant 1 : i32
    %0 = arith.muli %arg0, %c1_i32 : i32
    %1 = arith.addi %0, %arg1 : i32
    %c0_i32 = arith.constant 0 : i32
    %2 = arith.cmpi eq, %arg1, %c0_i32 : i32
    %3 = arith.extui %2 : i1 to i32
    %c0_i32_0 = arith.constant 0 : i32
    %4 = arith.cmpi ne, %3, %c0_i32_0 : i32
    scf.if %4 {
      %cst = arith.constant 0.000000e+00 : f32
      %8 = vector.broadcast %cst : f32 to vector<8x128xf32>
      %c0 = arith.constant 0 : index
      %c0_3 = arith.constant 0 : index
      %9 = vector.load %arg4[%c0, %c0_3] : memref<8x128xf32, #tpu.memory_space<vmem>>, vector<8x128xf32>
      tpu.vector_store %arg4[%c0, %c0_3], %8 {strides = array<i32>} : memref<8x128xf32, #tpu.memory_space<vmem>>, vector<8x128xf32>,
    } else {
    }
    %c1_i32_1 = arith.constant 1 : i32
    %5 = arith.cmpi slt, %1, %c1_i32_1 : i32
    %6 = arith.extui %5 : i1 to i32
    %c0_i32_2 = arith.constant 0 : i32
    %7 = arith.cmpi ne, %6, %c0_i32_2 : i32
    scf.if %7 {
      %c0_i32_3 = arith.constant 0 : i32
      %c16_i32 = arith.constant 16 : i32
      %8 = arith.muli %c0_i32_3, %c16_i32 : i32
      %9 = tpu.assume_multiple %8, 16 : i32
      %10 = arith.index_cast %9 : i32 to index
      %c0 = arith.constant 0 : index
      %11 = vector.load %arg2[%10, %c0] : memref<16x128xf32, #tpu.memory_space<vmem>>, vector<16x128xf32>
      %12 = arith.index_cast %9 : i32 to index
      %c0_4 = arith.constant 0 : index
      %13 = vector.load %arg3[%12, %c0_4] : memref<16x128xf32, #tpu.memory_space<vmem>>, vector<16x128xf32>
      %14 = math.log %11 : vector<16x128xf32>
      %cst = arith.constant -1.000000e+02 : f32
      %15 = vector.broadcast %cst : f32 to vector<16x128xf32>
      %16 = arith.maximumf %14, %15 : vector<16x128xf32>
      %cst_5 = arith.constant 1.000000e+00 : f32
      %17 = vector.broadcast %cst_5 : f32 to vector<16x128xf32>
      %18 = arith.subf %17, %11 : vector<16x128xf32>
      %19 = math.log %18 : vector<16x128xf32>
      %cst_6 = arith.constant -1.000000e+02 : f32
      %20 = vector.broadcast %cst_6 : f32 to vector<16x128xf32>
      %21 = arith.maximumf %19, %20 : vector<16x128xf32>
      %22 = arith.mulf %13, %16 : vector<16x128xf32>
      %cst_7 = arith.constant 1.000000e+00 : f32
      %23 = vector.broadcast %cst_7 : f32 to vector<16x128xf32>
      %24 = arith.subf %23, %13 : vector<16x128xf32>
      %25 = arith.mulf %24, %21 : vector<16x128xf32>
      %26 = arith.addf %22, %25 : vector<16x128xf32>
      %cst_8 = arith.constant 0.000000e+00 : f32
      %27 = vector.broadcast %cst_8 : f32 to vector<16x128xf32>
      %28 = arith.subf %27, %26 : vector<16x128xf32>
      %c0_9 = arith.constant 0 : index
      %c0_10 = arith.constant 0 : index
      %29 = vector.load %arg4[%c0_9, %c0_10] : memref<8x128xf32, #tpu.memory_space<vmem>>, vector<8x128xf32>
      %30 = vector.shape_cast %28 : vector<16x128xf32> to vector<2x8x128xf32>
      %cst_11 = arith.constant dense<0.000000e+00> : vector<8x128xf32>
      %31 = vector.multi_reduction <add>, %30, %cst_11 [0] : vector<2x8x128xf32> to vector<8x128xf32>
      %32 = arith.addf %29, %31 : vector<8x128xf32>
      %c0_12 = arith.constant 0 : index
      %c0_13 = arith.constant 0 : index
      %33 = vector.load %arg4[%c0_12, %c0_13] : memref<8x128xf32, #tpu.memory_space<vmem>>, vector<8x128xf32>
      tpu.vector_store %arg4[%c0_12, %c0_13], %32 {strides = array<i32>} : memref<8x128xf32, #tpu.memory_space<vmem>>, vector<8x128xf32>,
      %c1_i32_14 = arith.constant 1 : i32
    } else {
    }
    return
  }
  func.func @transform_0(%arg0: i32, %arg1: i32) -> (i32, i32) {
    %c1_i32 = arith.constant 1 : i32
    %0 = arith.muli %arg0, %c1_i32 : i32
    %1 = arith.addi %0, %arg1 : i32
    %c0_i32 = arith.constant 0 : i32
    %2 = arith.minsi %1, %c0_i32 : i32
    %c0_i32_0 = arith.constant 0 : i32
    %c0_i32_1 = arith.constant 0 : i32
    return %2, %c0_i32_0 : i32, i32
  }
  func.func @transform_1(%arg0: i32, %arg1: i32) -> (i32, i32) {
    %c1_i32 = arith.constant 1 : i32
    %0 = arith.muli %arg0, %c1_i32 : i32
    %1 = arith.addi %0, %arg1 : i32
    %c0_i32 = arith.constant 0 : i32
    %2 = arith.minsi %1, %c0_i32 : i32
    %c0_i32_0 = arith.constant 0 : i32
    %c0_i32_1 = arith.constant 0 : i32
    return %2, %c0_i32_0 : i32, i32
  }
  func.func @transform_2(%arg0: i32, %arg1: i32) -> (i32, i32) {
    %c0_i32 = arith.constant 0 : i32
    %c0_i32_0 = arith.constant 0 : i32
    return %arg0, %c0_i32 : i32, i32
  }
}

</mosaic_0001>

<llo_original>
// kernel: tpu_custom_call.1
$region0: #{tpu_custom_call.1}
  #allocation0 [shape = 'u32[]', space=smem, size = 0x4, offset = 0x4, fixed_abs, tag = 'smem constant byte address 0x4 - core index']
  #allocation1 [shape = 'u32[72,128]{1,0:T(1,128)}', space=vmem, size = 0x9000, scoped, tag = 'internal scratch']
  %s0 = inlined_call_operand.hbm [shape: f32[16,128], index: 0, kind: input, shape index: {}]
  %s1 = inlined_call_operand.hbm [shape: f32[16,128], index: 1, kind: input, shape index: {}]
  %s2 = inlined_call_operand.hbm [shape: f32[16,128], index: 2, kind: output, shape index: {}]
  %s3 = sld [smem:[#allocation0]]
  $region57: #{tpu_custom_call.1} parent=0
    _
  %s5 = ssub.s32 1, %s3
  %s6 = scalar_select 0, %s5, %s3
  $region1: #{tpu_custom_call.1} parent=0
    #allocation2 [shape = 'u8[16384]{0}', space=vmem, size = 0x4000, scoped, tag = 'input window, operand 0']
    #allocation3 [shape = 's32[2]{0}', space=sflag, size = 0x8, scoped, tag = 'scoped memory for tpu_custom_call.1']
    #allocation4 [shape = 's32[2]{0}', space=sflag, size = 0x8, scoped, tag = 'scoped memory for tpu_custom_call.1']
    #allocation5 [shape = 'u8[16384]{0}', space=vmem, size = 0x4000, scoped, tag = 'input window, operand 1']
    #allocation6 [shape = 's32[2]{0}', space=sflag, size = 0x8, scoped, tag = 'scoped memory for tpu_custom_call.1']
    #allocation7 [shape = 'u8[8192]{0}', space=vmem, size = 0x2000, scoped, tag = 'output window, operand 0']
    %7 = vsyncpa [#allocation3], 0
    %s8 = scalar_lea.sflag [#allocation3], 1
    %9 = vsyncpa %s8, 0
    %10 = vsyncpa [#allocation6], 0
    %s11 = scalar_lea.sflag [#allocation6], 1
    %12 = vsyncpa %s11, 0
    %13 = vsyncpa [#allocation4], 0
    %s14 = scalar_lea.sflag [#allocation4], 1
    %15 = vsyncpa %s14, 0
    loop: start=0, step=1, limit=4
    $region2: #{tpu_custom_call.1} parent=1 // loop_pre_header
      _
    $region3: #{tpu_custom_call.1} parent=1 // loop_header
      %s17 = sphi 0, %s21
      %p18 = scmp.ge.s32.totalorder %s17, 4
      %s24 = sphi 0, %s36
      %s25 = sphi 0, %s32
      %s26 = sphi 0, %s24
      %s27 = sphi 0, %s25
      %s28 = sphi 0, %s26
      %s29 = sphi 0, %s27
      %s45 = sphi 0, %s47
      %s48 = sphi 0, %s45
      %s49 = sphi 0, %s48
      %s65 = sphi 0, %s49
      %s77 = sphi 0, %s79
      %s80 = sphi 0, %s77
      %s81 = sphi 0, %s80
      %s97 = sphi 0, %s81
      %s103 = sphi 0, %s105
      %s106 = sphi 0, %s103
      %s107 = sphi 0, %s106
      %s123 = sphi 0, %s107
    $region4: #{tpu_custom_call.1} parent=1 // loop_header_branch
      %20 = sbr.rel (%p18) target = $region8
    $region5: #{tpu_custom_call.1} parent=1 // loop_body
      %s22 = ssub.s32 %s17, 1
      %s23 = ssub.s32 %s17, 2
      %s30 = sadd.s32 1, %s25
      %p31 = scmp.ge.s32.totalorder %s30, 1
      %s32 = scalar_select %p31, 0, %s30
      %s33 = sadd.s32 1, %s24
      %s34 = scalar_select %p31, %s33, %s24
      %p35 = scmp.ge.s32.totalorder %s34, 2
      %s36 = scalar_select %p35, 0, %s34
      %s37 = sadd.s32 %s24, %s25
      %p38 = scmp.lt.s32.totalorder %s37, 0
      %s39 = scalar_select %p38, %s37, 0
      %s40 = sadd.s32 %s36, %s32
      %p41 = scmp.lt.s32.totalorder %s40, 0
      %s42 = scalar_select %p41, %s40, 0
      %s43 = ssub.s32 %s39, %s42
      %p44 = scmp.eq.s32.totalorder %s43, 0
      %s46 = sadd.s32 %s45, 1
      %s47 = scalar_select %p44, %s45, %s46
      %p50 = pneg %p44
      %p51 = scmp.eq.s32.totalorder %s17, 1
      %p52 = por %p50, %p51
      %p53 = scmp.ne.s32.totalorder %s45, %s48
      %p54 = scmp.eq.s32.totalorder %s17, 0
      %p55 = por %p53, %p54
      %p56 = scmp.ne.s32.totalorder %s45, %s48
      %p57 = scmp.eq.s32.totalorder %s22, 1
      %p58 = por %p56, %p57
      %p59 = scmp.ne.s32.totalorder %s48, %s49
      %p60 = scmp.eq.s32.totalorder %s22, 0
      %p61 = por %p59, %p60
      %p62 = scmp.ne.s32.totalorder %s48, %s49
      %p63 = scmp.eq.s32.totalorder %s23, 1
      %p64 = por %p62, %p63
      %p66 = scmp.ne.s32.totalorder %s49, %s65
      %p67 = scmp.eq.s32.totalorder %s23, 0
      %p68 = por %p66, %p67
      %s69 = sadd.s32 %s24, %s25
      %p70 = scmp.lt.s32.totalorder %s69, 0
      %s71 = scalar_select %p70, %s69, 0
      %s72 = sadd.s32 %s36, %s32
      %p73 = scmp.lt.s32.totalorder %s72, 0
      %s74 = scalar_select %p73, %s72, 0
      %s75 = ssub.s32 %s71, %s74
      %p76 = scmp.eq.s32.totalorder %s75, 0
      %s78 = sadd.s32 %s77, 1
      %s79 = scalar_select %p76, %s77, %s78
      %p82 = pneg %p76
      %p83 = scmp.eq.s32.totalorder %s17, 1
      %p84 = por %p82, %p83
      %p85 = scmp.ne.s32.totalorder %s77, %s80
      %p86 = scmp.eq.s32.totalorder %s17, 0
      %p87 = por %p85, %p86
      %p88 = scmp.ne.s32.totalorder %s77, %s80
      %p89 = scmp.eq.s32.totalorder %s22, 1
      %p90 = por %p88, %p89
      %p91 = scmp.ne.s32.totalorder %s80, %s81
      %p92 = scmp.eq.s32.totalorder %s22, 0
      %p93 = por %p91, %p92
      %p94 = scmp.ne.s32.totalorder %s80, %s81
      %p95 = scmp.eq.s32.totalorder %s23, 1
      %p96 = por %p94, %p95
      %p98 = scmp.ne.s32.totalorder %s81, %s97
      %p99 = scmp.eq.s32.totalorder %s23, 0
      %p100 = por %p98, %p99
      %s101 = ssub.s32 %s24, %s36
      %p102 = scmp.eq.s32.totalorder %s101, 0
      %s104 = sadd.s32 %s103, 1
      %s105 = scalar_select %p102, %s103, %s104
      %p108 = pneg %p102
      %p109 = scmp.eq.s32.totalorder %s17, 1
      %p110 = por %p108, %p109
      %p111 = scmp.ne.s32.totalorder %s103, %s106
      %p112 = scmp.eq.s32.totalorder %s17, 0
      %p113 = por %p111, %p112
      %p114 = scmp.ne.s32.totalorder %s103, %s106
      %p115 = scmp.eq.s32.totalorder %s22, 1
      %p116 = por %p114, %p115
      %p117 = scmp.ne.s32.totalorder %s106, %s107
      %p118 = scmp.eq.s32.totalorder %s22, 0
      %p119 = por %p117, %p118
      %p120 = scmp.ne.s32.totalorder %s106, %s107
      %p121 = scmp.eq.s32.totalorder %s23, 1
      %p122 = por %p120, %p121
      %p124 = scmp.ne.s32.totalorder %s107, %s123
      %p125 = scmp.eq.s32.totalorder %s23, 0
      %p126 = por %p124, %p125
      %p127 = scmp.le.s32.totalorder 1, %s17
      %p128 = scmp.lt.s32.totalorder %s17, 3
      %p129 = pnand %p127, %p128
      %p130 = pneg %p129
      // Predicated region
      $region9: #{tpu_custom_call.1} parent=5 // pred_check
        _
      $region10: #{tpu_custom_call.1} parent=5 // pred_check_branch
        %132 = sbr.rel (%p129) target = $region12
      $region11: #{tpu_custom_call.1} parent=5 // pred_region
        %s133 = ssub.s32 %s17, 1
      $region12: #{tpu_custom_call.1} parent=5 // pred_fallthru
        _
      %p134 = scmp.lt.s32.totalorder %s17, 2
      // Predicated region
      $region13: #{tpu_custom_call.1} parent=5 // pred_check
        %p135 = pneg %p134
      $region14: #{tpu_custom_call.1} parent=5 // pred_check_branch
        %137 = sbr.rel (%p135) target = $region16
      $region15: #{tpu_custom_call.1} parent=5 // pred_region
        // Predicated region
        $region17: #{tpu_custom_call.1} parent=15 // pred_check
          %p138 = pneg %p55
        $region18: #{tpu_custom_call.1} parent=15 // pred_check_branch
          %140 = sbr.rel (%p138) target = $region20
        $region19: #{tpu_custom_call.1} parent=15 // pred_region
          %s141 = sand.u32 %s45, 1
          %s142 = scalar_lea.sflag [#allocation3], %s141
          %s143 = sand.u32 %s45, 1
          %s144 = smul.addr %s143, 16
          %s145 = scalar_lea.vmem [#allocation2], %s144
          %s146 = sadd.s32 %s24, %s25
          %p147 = scmp.lt.s32.totalorder %s146, 0
          %s148 = scalar_select %p147, %s146, 0
          %s149 = smul.u32 2, %s148
          %151 = vsyncadd %s142, 0
          %s152 = smul.addr %s149, 8
          %s153 = scalar_lea.hbm %s0, %s152
          %s154 = sshll.u32 %s153, 4
          %s155 = int_to_ptr.hbm [resolvable:$true] %s154
          %s156 = sshll.u32 %s145, 4
          %s157 = int_to_ptr.vmem [resolvable:$true] %s156
          %162 = dma.hbm_to_vmem [thread:$0]  %s155, 256, %s157, %s142, 128, 128, 8
        $region20: #{tpu_custom_call.1} parent=15 // pred_fallthru
          _
        // Predicated region
        $region21: #{tpu_custom_call.1} parent=15 // pred_check
          %p163 = pneg %p87
        $region22: #{tpu_custom_call.1} parent=15 // pred_check_branch
          %165 = sbr.rel (%p163) target = $region24
        $region23: #{tpu_custom_call.1} parent=15 // pred_region
          %s166 = sand.u32 %s77, 1
          %s167 = scalar_lea.sflag [#allocation6], %s166
          %s168 = sand.u32 %s77, 1
          %s169 = smul.addr %s168, 16
          %s170 = scalar_lea.vmem [#allocation5], %s169
          %s171 = sadd.s32 %s24, %s25
          %p172 = scmp.lt.s32.totalorder %s171, 0
          %s173 = scalar_select %p172, %s171, 0
          %s174 = smul.u32 2, %s173
          %176 = vsyncadd %s167, 0
          %s177 = smul.addr %s174, 8
          %s178 = scalar_lea.hbm %s1, %s177
          %s179 = sshll.u32 %s178, 4
          %s180 = int_to_ptr.hbm [resolvable:$true] %s179
          %s181 = sshll.u32 %s170, 4
          %s182 = int_to_ptr.vmem [resolvable:$true] %s181
          %187 = dma.hbm_to_vmem [thread:$0]  %s180, 256, %s182, %s167, 128, 128, 8
        $region24: #{tpu_custom_call.1} parent=15 // pred_fallthru
          _
      $region16: #{tpu_custom_call.1} parent=5 // pred_fallthru
        _
      %p188 = scmp.le.s32.totalorder 1, %s17
      %p189 = scmp.lt.s32.totalorder %s17, 3
      %p190 = pnand %p188, %p189
      %p191 = pneg %p190
      // Predicated region
      $region25: #{tpu_custom_call.1} parent=5 // pred_check
        _
      $region26: #{tpu_custom_call.1} parent=5 // pred_check_branch
        %193 = sbr.rel (%p190) target = $region28
      $region27: #{tpu_custom_call.1} parent=5 // pred_region
        %s194 = ssub.s32 %s17, 1
        %s195 = sand.u32 %s48, 1
        %s196 = scalar_lea.sflag [#allocation3], %s195
        %s197 = sand.u32 %s48, 1
        %s198 = smul.addr %s197, 16
        %s199 = scalar_lea.vmem [#allocation2], %s198
        // Predicated region
        $region29: #{tpu_custom_call.1} parent=27 // pred_check
          %p200 = pneg %p61
        $region30: #{tpu_custom_call.1} parent=27 // pred_check_branch
          %202 = sbr.rel (%p200) target = $region32
        $region31: #{tpu_custom_call.1} parent=27 // pred_region
          %204 = dma.done %s196, 256
        $region32: #{tpu_custom_call.1} parent=27 // pred_fallthru
          _
        %s205 = sand.u32 %s80, 1
        %s206 = scalar_lea.sflag [#allocation6], %s205
        %s207 = sand.u32 %s80, 1
        %s208 = smul.addr %s207, 16
        %s209 = scalar_lea.vmem [#allocation5], %s208
        // Predicated region
        $region33: #{tpu_custom_call.1} parent=27 // pred_check
          %p210 = pneg %p93
        $region34: #{tpu_custom_call.1} parent=27 // pred_check_branch
          %212 = sbr.rel (%p210) target = $region36
        $region35: #{tpu_custom_call.1} parent=27 // pred_region
          %214 = dma.done %s206, 256
        $region36: #{tpu_custom_call.1} parent=27 // pred_fallthru
          _
        %s215 = sand.u32 %s48, 1
        %s216 = scalar_lea.sflag [#allocation3], %s215
        %s217 = sand.u32 %s48, 1
        %s218 = smul.addr %s217, 16
        %s219 = scalar_lea.vmem [#allocation2], %s218
        %p220 = pneg %p61
        %p221 = pneg %p58
        %s222 = sand.u32 %s80, 1
        %s223 = scalar_lea.sflag [#allocation6], %s222
        %s224 = sand.u32 %s80, 1
        %s225 = smul.addr %s224, 16
        %s226 = scalar_lea.vmem [#allocation5], %s225
        %p227 = pneg %p93
        %p228 = pneg %p90
        %p229 = pneg %p119
        %p230 = pneg %p116
        %s231 = sand.u32 %s106, 1
        %s232 = scalar_lea.sflag [#allocation4], %s231
        %s233 = sand.u32 %s106, 1
        %s234 = smul.addr %s233, 8
        %s235 = scalar_lea.vmem [#allocation7], %s234
        %s236 = sadd.s32 %s26, %s27
        %p237 = scmp.lt.s32.totalorder %s236, 0
        %s238 = scalar_select %p237, %s236, 0
        %s239 = smul.u32 2, %s238
        %s240 = sadd.s32 %s26, %s27
        %p241 = scmp.lt.s32.totalorder %s240, 0
        %s242 = scalar_select %p241, %s240, 0
        %s243 = smul.u32 2, %s242
        %s244 = sadd.s32 %s26, %s27
        %p245 = scmp.eq.s32.totalorder %s27, 0
        // Predicated region
        $region37: #{tpu_custom_call.1} parent=27 // pred_check
          %p246 = pneg %p245
        $region38: #{tpu_custom_call.1} parent=27 // pred_check_branch
          %248 = sbr.rel (%p246) target = $region40
        $region39: #{tpu_custom_call.1} parent=27 // pred_region
          %249 = vst [vmem:[%s235] sm:$0xff] 0.0
        $region40: #{tpu_custom_call.1} parent=27 // pred_fallthru
          _
        %p250 = scmp.lt.s32.totalorder %s244, 1
        // Predicated region
        $region41: #{tpu_custom_call.1} parent=27 // pred_check
          %p251 = pneg %p250
        $region42: #{tpu_custom_call.1} parent=27 // pred_check_branch
          %253 = sbr.rel (%p251) target = $region44
        $region43: #{tpu_custom_call.1} parent=27 // pred_region
          %v254 = vld [vmem:[%s199] sm:$0xff]
          %v255 = vld [vmem:[%s199 + $0x8] sm:$0xff]
          %v256 = vld [vmem:[%s209] sm:$0xff]
          %v257 = vld [vmem:[%s209 + $0x8] sm:$0xff]
          %v258 = vlog2.pop %v254
          %v259 = vmul.f32 %v258, 0.6931472
          %v260 = vlog2.pop %v255
          %v261 = vmul.f32 %v260, 0.6931472
          %v262 = vmax.f32 %v259, -100.0
          %v263 = vmax.f32 %v261, -100.0
          %v264 = vsub.f32 1.0, %v254
          %v265 = vsub.f32 1.0, %v255
          %v266 = vlog2.pop %v264
          %v267 = vmul.f32 %v266, 0.6931472
          %v268 = vlog2.pop %v265
          %v269 = vmul.f32 %v268, 0.6931472
          %v270 = vmax.f32 %v267, -100.0
          %v271 = vmax.f32 %v269, -100.0
          %v272 = vmul.f32 %v256, %v262
          %v273 = vmul.f32 %v257, %v263
          %v274 = vsub.f32 1.0, %v256
          %v275 = vsub.f32 1.0, %v257
          %v276 = vmul.f32 %v274, %v270
          %v277 = vmul.f32 %v275, %v271
          %v278 = vadd.f32 %v272, %v276
          %v279 = vadd.f32 %v273, %v277
          %v280 = vsub.f32 0.0, %v278
          %v281 = vsub.f32 0.0, %v279
          %v282 = vld [vmem:[%s235] sm:$0xff]
          %v283 = vadd.f32 %v280, %v281
          %v284 = vadd.f32 %v282, %v283
          %285 = vst [vmem:[%s235] sm:$0xff] %v284
        $region44: #{tpu_custom_call.1} parent=27 // pred_fallthru
          _
        %s286 = sand.u32 %s106, 1
        %s287 = scalar_lea.sflag [#allocation4], %s286
        %s288 = sand.u32 %s106, 1
        %s289 = smul.addr %s288, 8
        %s290 = scalar_lea.vmem [#allocation7], %s289
        // Predicated region
        $region45: #{tpu_custom_call.1} parent=27 // pred_check
          %p291 = pneg %p116
        $region46: #{tpu_custom_call.1} parent=27 // pred_check_branch
          %293 = sbr.rel (%p291) target = $region48
        $region47: #{tpu_custom_call.1} parent=27 // pred_region
          %295 = vsyncadd %s287, 0
          %s296 = smul.addr %s26, 8
          %s297 = scalar_lea.hbm %s2, %s296
          %s299 = sshll.u32 %s290, 4
          %s300 = int_to_ptr.vmem [resolvable:$true] %s299
          %s301 = sshll.u32 %s297, 4
          %s302 = int_to_ptr.hbm [resolvable:$true] %s301
          %304 = dma.vmem_to_hbm [thread:$0]  %s300, 128, %s302, %s287
        $region48: #{tpu_custom_call.1} parent=27 // pred_fallthru
          _
      $region28: #{tpu_custom_call.1} parent=5 // pred_fallthru
        _
      %p305 = scmp.le.s32.totalorder 2, %s17
      // Predicated region
      $region49: #{tpu_custom_call.1} parent=5 // pred_check
        %p306 = pneg %p305
      $region50: #{tpu_custom_call.1} parent=5 // pred_check_branch
        %308 = sbr.rel (%p306) target = $region52
      $region51: #{tpu_custom_call.1} parent=5 // pred_region
        %s309 = ssub.s32 %s17, 2
        // Predicated region
        $region53: #{tpu_custom_call.1} parent=51 // pred_check
          %p310 = pneg %p122
        $region54: #{tpu_custom_call.1} parent=51 // pred_check_branch
          %312 = sbr.rel (%p310) target = $region56
        $region55: #{tpu_custom_call.1} parent=51 // pred_region
          %s313 = sand.u32 %s107, 1
          %s314 = scalar_lea.sflag [#allocation4], %s313
          %s315 = sand.u32 %s107, 1
          %s316 = smul.addr %s315, 8
          %s317 = scalar_lea.vmem [#allocation7], %s316
          %319 = dma.done %s314, 128
        $region56: #{tpu_custom_call.1} parent=51 // pred_fallthru
          _
      $region52: #{tpu_custom_call.1} parent=5 // pred_fallthru
        _
    $region6: #{tpu_custom_call.1} parent=1 // loop_footer
      %s21 = sadd.s32 1, %s17
    $region7: #{tpu_custom_call.1} parent=1 // loop_footer_branch
      %16 = sbr.rel target = $region3
    $region8: #{tpu_custom_call.1} parent=1 // loop_exit
      _
    %320 = vsyncpa [#allocation3], 1
    %s321 = scalar_lea.sflag [#allocation3], 1
    %322 = vsyncpa %s321, 1
    %323 = vsyncpa [#allocation6], 1
    %s324 = scalar_lea.sflag [#allocation6], 1
    %325 = vsyncpa %s324, 1
    %326 = vsyncpa [#allocation4], 1
    %s327 = scalar_lea.sflag [#allocation4], 1
    %328 = vsyncpa %s327, 1

</llo_original>
